<compile_context>
chip_gen: v6e
topology: v6e:2x2x1
jax: 0.10.0
libtpu: 0.0.40
codegen_flags: <defaults>
</compile_context>

<pallas_src>
import math

import jax
import jax.numpy as jnp
from jax.experimental import pallas as pl
from jax.experimental.pallas import tpu as pltpu

_SQRT_2_OVER_PI = math.sqrt(2.0 / math.pi)
_LANES = 128
_MAX_TILE_ROWS = 8192                    # 8192x128 elems -> 4 MiB/operand (f32)
_VMEM_LIMIT_BYTES = 32 * 1024 * 1024     # safe on v5e (128 MiB), v6e (128), v7x (64)


def _learnable_gelu_kernel(alpha_ref, x_ref, o_ref):
    x = x_ref[...].astype(jnp.float32)            # native-dtype load, f32 math
    alpha = alpha_ref[0]                          # prefetched scalar in SMEM
    inner = _SQRT_2_OVER_PI * (x + alpha * (x * x * x))
    y = 0.5 * x * (1.0 + jnp.tanh(inner))         # tanh -> EUP slot
    o_ref[...] = y.astype(o_ref.dtype)            # native-dtype store


def _sublane_granule(dtype):
    # Minimum second-minor tile size: f32 -> 8, bf16 -> 16, int8/fp8 -> 32.
    itemsize = jnp.dtype(dtype).itemsize
    return max(8, 32 // itemsize)


def learnable_gelu(x, alpha):
    """Apply LearnableGELU elementwise to an arbitrarily-shaped array."""
    orig_shape = x.shape
    dtype = x.dtype
    n = x.size
    granule = _sublane_granule(dtype)

    # Lane-dense (rows, 128) view; align rows only to the dtype tile granule.
    rows = pl.cdiv(n, _LANES)
    rows_aligned = pl.cdiv(rows, granule) * granule

    # Tile sizing: large slabs to amortize per-step overhead, >= 2 grid steps
    # so both v7x TensorCores participate, and tile_rows chosen so padding
    # stays below one granule per block (zero pad for typical aligned sizes).
    num_blocks = pl.cdiv(rows_aligned, _MAX_TILE_ROWS)
    num_blocks = max(num_blocks, 2)
    num_blocks = max(1, min(num_blocks, rows_aligned // granule))
    tile_rows = granule * pl.cdiv(rows_aligned, granule * num_blocks)
    rows_padded = num_blocks * tile_rows

    flat = x.reshape(-1)
    pad = rows_padded * _LANES - n
    if pad:
        flat = jnp.pad(flat, (0, pad))
    x2 = flat.reshape(rows_padded, _LANES)

    alpha_arr = jnp.asarray(alpha, jnp.float32).reshape(1)

    out = pl.pallas_call(
        _learnable_gelu_kernel,
        out_shape=jax.ShapeDtypeStruct((rows_padded, _LANES), dtype),
        grid_spec=pltpu.PrefetchScalarGridSpec(
            num_scalar_prefetch=1,                 # alpha -> SMEM before the grid
            grid=(num_blocks,),
            in_specs=[pl.BlockSpec((tile_rows, _LANES), lambda i, a: (i, 0))],
            out_specs=pl.BlockSpec((tile_rows, _LANES), lambda i, a: (i, 0)),
        ),
        compiler_params=pltpu.CompilerParams(
            dimension_semantics=("parallel",),
            vmem_limit_bytes=_VMEM_LIMIT_BYTES,
        ),
    )(alpha_arr, x2)

    if pad:
        return out.reshape(-1)[:n].reshape(orig_shape)
    return out.reshape(orig_shape)


def _reference(x, alpha):
    """Pure-JAX reference mirroring the PyTorch forward exactly (f32 math)."""
    x = x.astype(jnp.float32)
    c = jnp.sqrt(jnp.float32(2.0) / jnp.float32(jnp.pi))
    return 0.5 * x * (1.0 + jnp.tanh(c * (x + alpha * jnp.power(x, 3))))


if __name__ == "__main__":
    key = jax.random.PRNGKey(0)
    kx, ka = jax.random.split(key)

    # Small 4-D input (the module is shape-agnostic / elementwise).
    x = jax.random.normal(kx, (2, 4, 16, 16), jnp.float32)
    # Learnable scalar parameter (init 1.0 in the module; perturb a bit here).
    alpha = jnp.float32(1.0) + 0.1 * jax.random.normal(ka, (), jnp.float32)

    # f32 path.
    out = jax.block_until_ready(learnable_gelu(x, alpha))
    ref = _reference(x, alpha)
    assert out.shape == x.shape and out.dtype == x.dtype
    assert jnp.allclose(out, ref, rtol=1e-5, atol=1e-5), "f32 mismatch vs reference"

    # bf16 path (native-dtype streaming, f32 math inside the kernel).
    xb = x.astype(jnp.bfloat16)
    outb = jax.block_until_ready(learnable_gelu(xb, alpha))
    refb = _reference(xb.astype(jnp.float32), alpha).astype(jnp.bfloat16)
    assert outb.shape == xb.shape and outb.dtype == jnp.bfloat16
    assert jnp.allclose(outb.astype(jnp.float32), refb.astype(jnp.float32),
                        rtol=2e-2, atol=2e-2), "bf16 mismatch vs reference"

    print("KERNEL_OK")
</pallas_src>

<mosaic_0001>
module attributes {stable_mosaic.version = 11 : i64} {
  func.func @_learnable_gelu_kernel(%arg0: i32, %arg1: memref<1xf32, #tpu.memory_space<smem>>, %arg2: memref<8x128xf32, #tpu.memory_space<vmem>>, %arg3: memref<8x128xf32, #tpu.memory_space<vmem>>) attributes {dimension_semantics = [#tpu.dimension_semantics<parallel>], iteration_bounds = array<i64: 2>, scalar_prefetch = 1 : i64, scratch_operands = 0 : i64, tpu.core_type = #tpu.core_type<tc>, window_params = [{transform_indices = @transform_0, window_bounds = array<i64: 8, 128>}, {transform_indices = @transform_1, window_bounds = array<i64: 8, 128>}]} {
    %c0 = arith.constant 0 : index
    %c0_0 = arith.constant 0 : index
    %0 = vector.load %arg2[%c0, %c0_0] : memref<8x128xf32, #tpu.memory_space<vmem>>, vector<8x128xf32>
    %c0_1 = arith.constant 0 : index
    %1 = memref.load %arg1[%c0_1] : memref<1xf32, #tpu.memory_space<smem>>
    %2 = arith.mulf %0, %0 : vector<8x128xf32>
    %3 = arith.mulf %2, %0 : vector<8x128xf32>
    %4 = vector.broadcast %1 : f32 to vector<8x128xf32>
    %5 = arith.mulf %4, %3 : vector<8x128xf32>
    %6 = arith.addf %0, %5 : vector<8x128xf32>
    %cst = arith.constant 0.797884583 : f32
    %7 = vector.broadcast %cst : f32 to vector<8x128xf32>
    %8 = arith.mulf %7, %6 : vector<8x128xf32>
    %cst_2 = arith.constant 5.000000e-01 : f32
    %9 = vector.broadcast %cst_2 : f32 to vector<8x128xf32>
    %10 = arith.mulf %9, %0 : vector<8x128xf32>
    %11 = math.tanh %8 : vector<8x128xf32>
    %cst_3 = arith.constant 1.000000e+00 : f32
    %12 = vector.broadcast %cst_3 : f32 to vector<8x128xf32>
    %13 = arith.addf %12, %11 : vector<8x128xf32>
    %14 = arith.mulf %10, %13 : vector<8x128xf32>
    %c0_4 = arith.constant 0 : index
    %c0_5 = arith.constant 0 : index
    %15 = vector.load %arg3[%c0_4, %c0_5] : memref<8x128xf32, #tpu.memory_space<vmem>>, vector<8x128xf32>
    tpu.vector_store %arg3[%c0_4, %c0_5], %14 {strides = array<i32>} : memref<8x128xf32, #tpu.memory_space<vmem>>, vector<8x128xf32>,
    return
  }
  func.func @transform_0(%arg0: i32, %arg1: memref<1xf32, #tpu.memory_space<smem>>) -> (i32, i32) {
    %c0_i32 = arith.constant 0 : i32
    %c0_i32_0 = arith.constant 0 : i32
    return %arg0, %c0_i32 : i32, i32
  }
  func.func @transform_1(%arg0: i32, %arg1: memref<1xf32, #tpu.memory_space<smem>>) -> (i32, i32) {
    %c0_i32 = arith.constant 0 : i32
    %c0_i32_0 = arith.constant 0 : i32
    return %arg0, %c0_i32 : i32, i32
  }
}

</mosaic_0001>

<llo_original>
// kernel: tpu_custom_call.1
$region0: #{tpu_custom_call.1}
  #allocation0 [shape = 'u32[]', space=smem, size = 0x4, offset = 0x4, fixed_abs, tag = 'smem constant byte address 0x4 - core index']
  #allocation1 [shape = 'u32[144,128]{1,0:T(1,128)}', space=vmem, size = 0x12000, scoped, tag = 'internal scratch']
  #allocation2 [shape = 's32[1]{0}', space=sflag, size = 0x4, scoped, tag = 'scoped memory for tpu_custom_call.1']
  #allocation3 [shape = 'f32[1]{0:T(128)S(6)}', space=smem, size = 0x200, scoped, tag = 'prefetched SMEM operand 0']
  %s0 = inlined_call_operand.<no memory space> [shape: f32[1], index: 0, kind: input, shape index: {}]
  %s1 = inlined_call_operand.hbm [shape: f32[16,128], index: 1, kind: input, shape index: {}]
  %s2 = inlined_call_operand.hbm [shape: f32[16,128], index: 2, kind: output, shape index: {}]
  %s3 = sld [smem:[#allocation0]]
  $region41: #{tpu_custom_call.1} parent=0
    _
  %s5 = ssub.s32 1, %s3
  %s6 = scalar_select 0, %s5, %s3
  %7 = sst [smem:[#allocation3]] %s0
  $region1: #{tpu_custom_call.1} parent=0
    #allocation4 [shape = 'u8[8192]{0}', space=vmem, size = 0x2000, scoped, tag = 'input window, operand 1']
    #allocation5 [shape = 's32[2]{0}', space=sflag, size = 0x8, scoped, tag = 'scoped memory for tpu_custom_call.1']
    #allocation6 [shape = 's32[2]{0}', space=sflag, size = 0x8, scoped, tag = 'scoped memory for tpu_custom_call.1']
    #allocation7 [shape = 'u8[8192]{0}', space=vmem, size = 0x2000, scoped, tag = 'output window, operand 0']
    %8 = vsyncpa [#allocation5], 0
    %s9 = scalar_lea.sflag [#allocation5], 1
    %10 = vsyncpa %s9, 0
    %11 = vsyncpa [#allocation6], 0
    %s12 = scalar_lea.sflag [#allocation6], 1
    %13 = vsyncpa %s12, 0
    loop: start=0, step=1, limit=4
    $region2: #{tpu_custom_call.1} parent=1 // loop_pre_header
      _
    $region3: #{tpu_custom_call.1} parent=1 // loop_header
      %s15 = sphi 0, %s19
      %p16 = scmp.ge.s32.totalorder %s15, 4
      %s25 = sphi 0, %s27
      %s28 = sphi 0, %s25
      %s29 = sphi 0, %s28
      %s45 = sphi 0, %s29
      %s51 = sphi 0, %s53
      %s54 = sphi 0, %s51
      %s55 = sphi 0, %s54
      %s71 = sphi 0, %s55
    $region4: #{tpu_custom_call.1} parent=1 // loop_header_branch
      %18 = sbr.rel (%p16) target = $region8
    $region5: #{tpu_custom_call.1} parent=1 // loop_body
      %s20 = ssub.s32 %s15, 1
      %s21 = ssub.s32 %s15, 2
      %s22 = sadd.s32 %s15, 1
      %s23 = ssub.s32 %s15, %s22
      %p24 = scmp.eq.s32.totalorder %s23, 0
      %s26 = sadd.s32 %s25, 1
      %s27 = scalar_select %p24, %s25, %s26
      %p30 = pneg %p24
      %p31 = scmp.eq.s32.totalorder %s15, 1
      %p32 = por %p30, %p31
      %p33 = scmp.ne.s32.totalorder %s25, %s28
      %p34 = scmp.eq.s32.totalorder %s15, 0
      %p35 = por %p33, %p34
      %p36 = scmp.ne.s32.totalorder %s25, %s28
      %p37 = scmp.eq.s32.totalorder %s20, 1
      %p38 = por %p36, %p37
      %p39 = scmp.ne.s32.totalorder %s28, %s29
      %p40 = scmp.eq.s32.totalorder %s20, 0
      %p41 = por %p39, %p40
      %p42 = scmp.ne.s32.totalorder %s28, %s29
      %p43 = scmp.eq.s32.totalorder %s21, 1
      %p44 = por %p42, %p43
      %p46 = scmp.ne.s32.totalorder %s29, %s45
      %p47 = scmp.eq.s32.totalorder %s21, 0
      %p48 = por %p46, %p47
      %s49 = ssub.s32 %s15, %s22
      %p50 = scmp.eq.s32.totalorder %s49, 0
      %s52 = sadd.s32 %s51, 1
      %s53 = scalar_select %p50, %s51, %s52
      %p56 = pneg %p50
      %p57 = scmp.eq.s32.totalorder %s15, 1
      %p58 = por %p56, %p57
      %p59 = scmp.ne.s32.totalorder %s51, %s54
      %p60 = scmp.eq.s32.totalorder %s15, 0
      %p61 = por %p59, %p60
      %p62 = scmp.ne.s32.totalorder %s51, %s54
      %p63 = scmp.eq.s32.totalorder %s20, 1
      %p64 = por %p62, %p63
      %p65 = scmp.ne.s32.totalorder %s54, %s55
      %p66 = scmp.eq.s32.totalorder %s20, 0
      %p67 = por %p65, %p66
      %p68 = scmp.ne.s32.totalorder %s54, %s55
      %p69 = scmp.eq.s32.totalorder %s21, 1
      %p70 = por %p68, %p69
      %p72 = scmp.ne.s32.totalorder %s55, %s71
      %p73 = scmp.eq.s32.totalorder %s21, 0
      %p74 = por %p72, %p73
      %p75 = scmp.le.s32.totalorder 1, %s15
      %p76 = scmp.lt.s32.totalorder %s15, 3
      %p77 = pnand %p75, %p76
      %p78 = pneg %p77
      // Predicated region
      $region9: #{tpu_custom_call.1} parent=5 // pred_check
        _
      $region10: #{tpu_custom_call.1} parent=5 // pred_check_branch
        %80 = sbr.rel (%p77) target = $region12
      $region11: #{tpu_custom_call.1} parent=5 // pred_region
        %s81 = ssub.s32 %s15, 1
      $region12: #{tpu_custom_call.1} parent=5 // pred_fallthru
        _
      %p82 = scmp.lt.s32.totalorder %s15, 2
      // Predicated region
      $region13: #{tpu_custom_call.1} parent=5 // pred_check
        %p83 = pneg %p82
      $region14: #{tpu_custom_call.1} parent=5 // pred_check_branch
        %85 = sbr.rel (%p83) target = $region16
      $region15: #{tpu_custom_call.1} parent=5 // pred_region
        // Predicated region
        $region17: #{tpu_custom_call.1} parent=15 // pred_check
          %p86 = pneg %p35
        $region18: #{tpu_custom_call.1} parent=15 // pred_check_branch
          %88 = sbr.rel (%p86) target = $region20
        $region19: #{tpu_custom_call.1} parent=15 // pred_region
          %s89 = sand.u32 %s25, 1
          %s90 = scalar_lea.sflag [#allocation5], %s89
          %s91 = sand.u32 %s25, 1
          %s92 = smul.addr %s91, 8
          %s93 = scalar_lea.vmem [#allocation4], %s92
          %s95 = ssub.s32 128, 128
          %96 = vsyncadd %s90, %s95
          %s97 = smul.addr %s15, 128
          %s98 = scalar_lea.hbm %s1, %s97
          %s100 = sshll.u32 %s93, 4
          %s101 = int_to_ptr.vmem [resolvable:$true] %s100
          %103 = dma.hbm_to_vmem [thread:$0]  %s98, 128, %s101, %s90
        $region20: #{tpu_custom_call.1} parent=15 // pred_fallthru
          _
      $region16: #{tpu_custom_call.1} parent=5 // pred_fallthru
        _
      %p104 = scmp.le.s32.totalorder 1, %s15
      %p105 = scmp.lt.s32.totalorder %s15, 3
      %p106 = pnand %p104, %p105
      %p107 = pneg %p106
      // Predicated region
      $region21: #{tpu_custom_call.1} parent=5 // pred_check
        _
      $region22: #{tpu_custom_call.1} parent=5 // pred_check_branch
        %109 = sbr.rel (%p106) target = $region24
      $region23: #{tpu_custom_call.1} parent=5 // pred_region
        %s110 = ssub.s32 %s15, 1
        %s111 = sand.u32 %s28, 1
        %s112 = scalar_lea.sflag [#allocation5], %s111
        %s113 = sand.u32 %s28, 1
        %s114 = smul.addr %s113, 8
        %s115 = scalar_lea.vmem [#allocation4], %s114
        // Predicated region
        $region25: #{tpu_custom_call.1} parent=23 // pred_check
          %p116 = pneg %p41
        $region26: #{tpu_custom_call.1} parent=23 // pred_check_branch
          %118 = sbr.rel (%p116) target = $region28
        $region27: #{tpu_custom_call.1} parent=23 // pred_region
          %119 = dma.done %s112, 128
        $region28: #{tpu_custom_call.1} parent=23 // pred_fallthru
          _
        %s120 = sand.u32 %s28, 1
        %s121 = scalar_lea.sflag [#allocation5], %s120
        %s122 = sand.u32 %s28, 1
        %s123 = smul.addr %s122, 8
        %s124 = scalar_lea.vmem [#allocation4], %s123
        %p125 = pneg %p41
        %p126 = pneg %p38
        %p127 = pneg %p67
        %p128 = pneg %p64
        %s129 = sand.u32 %s54, 1
        %s130 = scalar_lea.sflag [#allocation6], %s129
        %s131 = sand.u32 %s54, 1
        %s132 = smul.addr %s131, 8
        %s133 = scalar_lea.vmem [#allocation7], %s132
        %v134 = vld [vmem:[%s115] sm:$0xff]
        %s135 = sld [smem:[#allocation3]]
        %v136 = vmul.f32 %v134, %v134
        %v137 = vmul.f32 %v136, %v134
        %v138 = vstv %s135
        %v139 = vmul.f32 %v138, %v137
        %v140 = vadd.f32 %v134, %v139
        %v141 = vmul.f32 %v140, 0.7978846
        %v142 = vmul.f32 %v134, 0.5
        %v143 = vtanh.pop %v141
        %v144 = vadd.f32 %v143, 1.0
        %v145 = vmul.f32 %v142, %v144
        %146 = vst [vmem:[%s133] sm:$0xff] %v145
        %s147 = sand.u32 %s54, 1
        %s148 = scalar_lea.sflag [#allocation6], %s147
        %s149 = sand.u32 %s54, 1
        %s150 = smul.addr %s149, 8
        %s151 = scalar_lea.vmem [#allocation7], %s150
        // Predicated region
        $region29: #{tpu_custom_call.1} parent=23 // pred_check
          %p152 = pneg %p64
        $region30: #{tpu_custom_call.1} parent=23 // pred_check_branch
          %154 = sbr.rel (%p152) target = $region32
        $region31: #{tpu_custom_call.1} parent=23 // pred_region
          %s156 = ssub.s32 128, 128
          %157 = vsyncadd %s148, %s156
          %s158 = smul.addr %s20, 128
          %s159 = scalar_lea.hbm %s2, %s158
          %s161 = sshll.u32 %s151, 4
          %s162 = int_to_ptr.vmem [resolvable:$true] %s161
          %164 = dma.vmem_to_hbm [thread:$0]  %s162, 128, %s159, %s148
        $region32: #{tpu_custom_call.1} parent=23 // pred_fallthru
          _
      $region24: #{tpu_custom_call.1} parent=5 // pred_fallthru
        _
      %p165 = scmp.le.s32.totalorder 2, %s15
      // Predicated region
      $region33: #{tpu_custom_call.1} parent=5 // pred_check
        %p166 = pneg %p165
      $region34: #{tpu_custom_call.1} parent=5 // pred_check_branch
        %168 = sbr.rel (%p166) target = $region36
      $region35: #{tpu_custom_call.1} parent=5 // pred_region
        %s169 = ssub.s32 %s15, 2
        // Predicated region
        $region37: #{tpu_custom_call.1} parent=35 // pred_check
          %p170 = pneg %p70
        $region38: #{tpu_custom_call.1} parent=35 // pred_check_branch
          %172 = sbr.rel (%p170) target = $region40
        $region39: #{tpu_custom_call.1} parent=35 // pred_region
          %s173 = sand.u32 %s55, 1
          %s174 = scalar_lea.sflag [#allocation6], %s173
          %s175 = sand.u32 %s55, 1
          %s176 = smul.addr %s175, 8
          %s177 = scalar_lea.vmem [#allocation7], %s176
          %178 = dma.done %s174, 128
        $region40: #{tpu_custom_call.1} parent=35 // pred_fallthru
          _
      $region36: #{tpu_custom_call.1} parent=5 // pred_fallthru
        _
    $region6: #{tpu_custom_call.1} parent=1 // loop_footer
      %s19 = sadd.s32 1, %s15
    $region7: #{tpu_custom_call.1} parent=1 // loop_footer_branch
      %14 = sbr.rel target = $region3
    $region8: #{tpu_custom_call.1} parent=1 // loop_exit
      _
    %179 = vsyncpa [#allocation5], 1
    %s180 = scalar_lea.sflag [#allocation5], 1
    %181 = vsyncpa %s180, 1
    %182 = vsyncpa [#allocation6], 1
    %s183 = scalar_lea.sflag [#allocation6], 1
    %184 = vsyncpa %s183, 1

</llo_original>
